<compile_context>
chip_gen: v5e
topology: v5e:2x2
jax: 0.10.0
libtpu: 0.0.40
codegen_flags: <defaults>
</compile_context>

<pallas_src>
import jax
import jax.numpy as jnp
from jax.experimental import pallas as pl
from jax.experimental.pallas import tpu as pltpu


def _implicit_head_kernel(x_ref, w_ref, b_ref, o_ref):
    # x_ref : (C, TL)   activation tile (channels x spatial), lane axis = spatial
    # w_ref : (ch, C)   folded weight  (im * W)
    # b_ref : (ch, 1)   folded bias    (im * (W @ ia + b))
    # o_ref : (ch, TL)  lane-dense output tile
    y = jnp.dot(w_ref[...], x_ref[...], preferred_element_type=jnp.float32)
    o_ref[...] = (y + b_ref[...]).astype(o_ref.dtype)


def _choose_spatial_tile(hw, c, ch, itemsize=4, budget_bytes=16 * 1024 * 1024):
    """Largest lane-aligned spatial tile that divides hw and fits a safe VMEM budget."""
    if hw % 128 != 0:
        # Full extent satisfies the (8,128) rule even when hw < 128 or hw is
        # not lane-aligned (detection-head spatial extents are small enough
        # that a full-extent tile always fits VMEM for realistic C).
        return hw
    # Double-buffered input + output tiles, per spatial element.
    per_elem = (c + ch) * itemsize * 2
    cap = max(128, min(2048, (budget_bytes // max(per_elem, 1)) // 128 * 128))
    for cand in range(cap, 127, -128):
        if hw % cand == 0:
            return cand
    return 128


def implicit_head_scale(x_nchw, ia, w, b, im):
    """One scale of ImplicitHead.

    x_nchw: [N, C, H, W]
    ia    : [C]      ImplicitA parameter
    w     : [ch, C]  Conv2d(C, ch, kernel=1) weight (squeezed over the 1x1 taps)
    b     : [ch]     conv bias
    im    : [ch]     ImplicitM parameter
    returns [N, ch, H, W]
    """
    N, C, H, W = x_nchw.shape
    ch = w.shape[0]
    HW = H * W

    # Weight-sized preprocessing (once per call; could live at param-prep time).
    w_f32 = w.astype(jnp.float32)
    w_eff = (w_f32 * im.astype(jnp.float32)[:, None]).astype(x_nchw.dtype)    # (ch, C)
    b_eff = (im.astype(jnp.float32)
             * (w_f32 @ ia.astype(jnp.float32) + b.astype(jnp.float32)))       # (ch,)
    b_eff = b_eff.reshape(ch, 1).astype(jnp.float32)

    # Free reshape: NCHW -> (N, C, HW). No transposes on the activation path.
    x3 = x_nchw.reshape(N, C, HW)

    TL = _choose_spatial_tile(HW, C, ch, jnp.dtype(x_nchw.dtype).itemsize)
    assert HW % TL == 0
    grid = (N, HW // TL)

    out3 = pl.pallas_call(
        _implicit_head_kernel,
        out_shape=jax.ShapeDtypeStruct((N, ch, HW), x_nchw.dtype),
        grid_spec=pltpu.PrefetchScalarGridSpec(
            num_scalar_prefetch=0,
            grid=grid,
            in_specs=[
                # Batch dim squeezed out of the kernel ref; channel dims use
                # full extent (C, ch are small and ch need not be 8-aligned).
                pl.BlockSpec((None, C, TL), lambda n, j: (n, 0, j)),
                pl.BlockSpec((ch, C), lambda n, j: (0, 0)),
                pl.BlockSpec((ch, 1), lambda n, j: (0, 0)),
            ],
            out_specs=pl.BlockSpec((None, ch, TL), lambda n, j: (n, 0, j)),
        ),
        compiler_params=pltpu.CompilerParams(
            dimension_semantics=("parallel", "parallel")),
    )(x3, w_eff, b_eff)

    # Free reshape back: (N, ch, HW) -> NCHW
    return out3.reshape(N, ch, H, W)


def make_params(key, num_classes, num_anchors, in_channels):
    """Deterministic synthetic parameters matching ImplicitHead.__init__ shapes."""
    ch = num_anchors * (5 + num_classes)
    params = []
    for i, c in enumerate(in_channels):
        k_ia, k_w, k_b, k_im = jax.random.split(jax.random.fold_in(key, i), 4)
        ia = 0.02 * jax.random.normal(k_ia, (c,), jnp.float32)      # ImplicitA ~ N(0, 0.02)
        w = 0.05 * jax.random.normal(k_w, (ch, c), jnp.float32)     # Conv2d 1x1 weight
        b = 0.05 * jax.random.normal(k_b, (ch,), jnp.float32)       # Conv2d bias
        im = 0.02 * jax.random.normal(k_im, (ch,), jnp.float32)     # ImplicitM ~ N(0, 0.02)
        params.append((ia, w, b, im))
    return params


def implicit_head_forward(inputs, params):
    # TODO(synk): QuantStub / DeQuantStub have no Pallas equivalent; identity in fp eval mode.
    return [implicit_head_scale(x, *p) for x, p in zip(inputs, params)]


def _reference(inputs, params):
    outs = []
    for x, (ia, w, b, im) in zip(inputs, params):
        xa = x + ia[None, :, None, None]
        y = jnp.einsum("nchw,oc->nohw", xa, w) + b[None, :, None, None]
        outs.append(y * im[None, :, None, None])
    return outs


if __name__ == "__main__":
    key = jax.random.PRNGKey(0)

    num_classes = 3
    num_anchors = 3
    in_channels = (4, 8)

    params = make_params(key, num_classes, num_anchors, in_channels)

    k1, k2 = jax.random.split(jax.random.fold_in(key, 100), 2)
    x0 = jax.random.normal(k1, (2, 4, 16, 16), jnp.float32)   # scale 0: N=2, C=4, 16x16
    x1 = jax.random.normal(k2, (2, 8, 8, 8), jnp.float32)     # scale 1: N=2, C=8, 8x8
    inputs = [x0, x1]

    outs = implicit_head_forward(inputs, params)
    outs = [jax.block_until_ready(o) for o in outs]

    refs = _reference(inputs, params)
    for o, r in zip(outs, refs):
        assert o.shape == r.shape, (o.shape, r.shape)
        # Folding ia/b/im into the weights reorders f32 rounding vs the
        # reference ((x+ia)@W vs x@W + ia@W); well within 1e-4.
        assert jnp.allclose(o, r, atol=1e-4, rtol=1e-4), float(jnp.max(jnp.abs(o - r)))

    print("KERNEL_OK")
</pallas_src>

<mosaic_0001>
module attributes {stable_mosaic.version = 11 : i64} {
  func.func @_implicit_head_kernel(%arg0: i32, %arg1: i32, %arg2: memref<1x4x256xf32, #tpu.memory_space<vmem>>, %arg3: memref<24x4xf32, #tpu.memory_space<vmem>>, %arg4: memref<24x1xf32, #tpu.memory_space<vmem>>, %arg5: memref<1x24x256xf32, #tpu.memory_space<vmem>>) attributes {dimension_semantics = [#tpu.dimension_semantics<parallel>, #tpu.dimension_semantics<parallel>], iteration_bounds = array<i64: 2, 1>, scalar_prefetch = 0 : i64, scratch_operands = 0 : i64, tpu.core_type = #tpu.core_type<tc>, window_params = [{transform_indices = @transform_0, window_bounds = array<i64: 1, 4, 256>}, {pipeline_mode = #tpu.pipeline_mode<synchronous>, transform_indices = @transform_1, window_bounds = array<i64: 24, 4>}, {pipeline_mode = #tpu.pipeline_mode<synchronous>, transform_indices = @transform_2, window_bounds = array<i64: 24, 1>}, {transform_indices = @transform_3, window_bounds = array<i64: 1, 24, 256>}]} {
    %c0 = arith.constant 0 : index
    %c0_0 = arith.constant 0 : index
    %0 = vector.load %arg3[%c0, %c0_0] : memref<24x4xf32, #tpu.memory_space<vmem>>, vector<24x4xf32>
    %c0_1 = arith.constant 0 : index
    %c0_2 = arith.constant 0 : index
    %c0_3 = arith.constant 0 : index
    %1 = vector.load %arg2[%c0_1, %c0_2, %c0_3] : memref<1x4x256xf32, #tpu.memory_space<vmem>>, vector<1x4x256xf32>
    %2 = vector.shape_cast %1 : vector<1x4x256xf32> to vector<4x256xf32>
    %cst = arith.constant dense<0.000000e+00> : vector<24x256xf32>
    %3 = tpu.matmul %0, %2, %cst {dimension_numbers = #tpu.dot_dimension_numbers<[1], [0], [0], [1], [0, 0, 1, 1], [], []>} : vector<24x4xf32>, vector<4x256xf32>, vector<24x256xf32> -> vector<24x256xf32>
    %c0_4 = arith.constant 0 : index
    %c0_5 = arith.constant 0 : index
    %4 = vector.load %arg4[%c0_4, %c0_5] : memref<24x1xf32, #tpu.memory_space<vmem>>, vector<24x1xf32>
    %5 = vector.broadcast %4 : vector<24x1xf32> to vector<24x256xf32>
    %6 = arith.addf %3, %5 : vector<24x256xf32>
    %c0_6 = arith.constant 0 : index
    %c0_7 = arith.constant 0 : index
    %c0_8 = arith.constant 0 : index
    %7 = vector.load %arg5[%c0_6, %c0_7, %c0_8] : memref<1x24x256xf32, #tpu.memory_space<vmem>>, vector<1x24x256xf32>
    %8 = vector.shape_cast %7 : vector<1x24x256xf32> to vector<24x256xf32>
    %9 = vector.shape_cast %6 : vector<24x256xf32> to vector<1x24x256xf32>
    tpu.vector_store %arg5[%c0_6, %c0_7, %c0_8], %9 {strides = array<i32>} : memref<1x24x256xf32, #tpu.memory_space<vmem>>, vector<1x24x256xf32>,
    return
  }
  func.func @transform_0(%arg0: i32, %arg1: i32) -> (i32, i32, i32) {
    %c0_i32 = arith.constant 0 : i32
    %c0_i32_0 = arith.constant 0 : i32
    return %arg0, %c0_i32, %arg1 : i32, i32, i32
  }
  func.func @transform_1(%arg0: i32, %arg1: i32) -> (i32, i32) {
    %c0_i32 = arith.constant 0 : i32
    %c0_i32_0 = arith.constant 0 : i32
    %c0_i32_1 = arith.constant 0 : i32
    return %c0_i32, %c0_i32_0 : i32, i32
  }
  func.func @transform_2(%arg0: i32, %arg1: i32) -> (i32, i32) {
    %c0_i32 = arith.constant 0 : i32
    %c0_i32_0 = arith.constant 0 : i32
    %c0_i32_1 = arith.constant 0 : i32
    return %c0_i32, %c0_i32_0 : i32, i32
  }
  func.func @transform_3(%arg0: i32, %arg1: i32) -> (i32, i32, i32) {
    %c0_i32 = arith.constant 0 : i32
    %c0_i32_0 = arith.constant 0 : i32
    return %arg0, %c0_i32, %arg1 : i32, i32, i32
  }
}

</mosaic_0001>

<llo_original>
// kernel: tpu_custom_call.1
$region0: #{tpu_custom_call.1}
  #allocation0 [shape = 'u32[]', space=smem, size = 0x4, offset = 0x4, fixed_abs, tag = 'smem constant byte address 0x4 - core index']
  #allocation1 [shape = 'u32[72,128]{1,0:T(1,128)}', space=vmem, size = 0x9000, scoped, tag = 'internal scratch']
  %s0 = inlined_call_operand.vmem [shape: f32[2,4,256], index: 0, kind: input, shape index: {}]
  %s1 = inlined_call_operand.vmem [shape: f32[24,4], index: 1, kind: input, shape index: {}]
  %s2 = inlined_call_operand.vmem [shape: f32[24,1], index: 2, kind: input, shape index: {}]
  %s3 = inlined_call_operand.hbm [shape: f32[2,24,256], index: 3, kind: output, shape index: {}]
  %s4 = sld [smem:[#allocation0]]
  $region45: #{tpu_custom_call.1} parent=0
    _
  %s6 = ssub.s32 1, %s4
  %s7 = scalar_select 0, %s6, %s4
  $region1: #{tpu_custom_call.1} parent=0
    #allocation2 [shape = 'u8[49152]{0}', space=vmem, size = 0xc000, scoped, tag = 'output window, operand 0']
    #allocation3 [shape = 's32[2]{0}', space=sflag, size = 0x8, scoped, tag = 'scoped memory for tpu_custom_call.1']
    %8 = vsyncpa [#allocation3], 0
    %s9 = scalar_lea.sflag [#allocation3], 1
    %10 = vsyncpa %s9, 0
    loop: start=0, step=1, limit=4
    $region2: #{tpu_custom_call.1} parent=1 // loop_pre_header
      _
    $region3: #{tpu_custom_call.1} parent=1 // loop_header
      %s12 = sphi 0, %s16
      %p13 = scmp.ge.s32.totalorder %s12, 4
      %s19 = sphi 0, %s31
      %s20 = sphi 0, %s27
      %s21 = sphi 0, %s19
      %s22 = sphi 0, %s20
      %s23 = sphi 0, %s21
      %s24 = sphi 0, %s22
      %s36 = sphi 0, %s38
      %s39 = sphi 0, %s36
      %s40 = sphi 0, %s39
      %s56 = sphi 0, %s40
      %s60 = sphi 0, %s60
      %s62 = sphi 0, %s60
      %s63 = sphi 0, %s62
      %s77 = sphi 0, %s63
      %s81 = sphi 0, %s81
      %s83 = sphi 0, %s81
      %s84 = sphi 0, %s83
      %s98 = sphi 0, %s84
      %s106 = sphi 0, %s108
      %s109 = sphi 0, %s106
      %s110 = sphi 0, %s109
      %s126 = sphi 0, %s110
    $region4: #{tpu_custom_call.1} parent=1 // loop_header_branch
      %15 = sbr.rel (%p13) target = $region8
    $region5: #{tpu_custom_call.1} parent=1 // loop_body
      %s17 = ssub.s32 %s12, 1
      %s18 = ssub.s32 %s12, 2
      %s25 = sadd.s32 1, %s20
      %p26 = scmp.ge.s32.totalorder %s25, 1
      %s27 = scalar_select %p26, 0, %s25
      %s28 = sadd.s32 1, %s19
      %s29 = scalar_select %p26, %s28, %s19
      %p30 = scmp.ge.s32.totalorder %s29, 2
      %s31 = scalar_select %p30, 0, %s29
      %s32 = ssub.s32 %s19, %s31
      %s33 = ssub.s32 %s20, %s27
      %s34 = sor.u32 %s32, %s33
      %p35 = scmp.eq.s32.totalorder %s34, 0
      %s37 = sadd.s32 %s36, 1
      %s38 = scalar_select %p35, %s36, %s37
      %p41 = pneg %p35
      %p42 = scmp.eq.s32.totalorder %s12, 1
      %p43 = por %p41, %p42
      %p44 = scmp.ne.s32.totalorder %s36, %s39
      %p45 = scmp.eq.s32.totalorder %s12, 0
      %p46 = por %p44, %p45
      %p47 = scmp.ne.s32.totalorder %s36, %s39
      %p48 = scmp.eq.s32.totalorder %s17, 1
      %p49 = por %p47, %p48
      %p50 = scmp.ne.s32.totalorder %s39, %s40
      %p51 = scmp.eq.s32.totalorder %s17, 0
      %p52 = por %p50, %p51
      %p53 = scmp.ne.s32.totalorder %s39, %s40
      %p54 = scmp.eq.s32.totalorder %s18, 1
      %p55 = por %p53, %p54
      %p57 = scmp.ne.s32.totalorder %s40, %s56
      %p58 = scmp.eq.s32.totalorder %s18, 0
      %p59 = por %p57, %p58
      %s61 = sadd.s32 %s60, 1
      %p64 = scmp.eq.s32.totalorder %s12, 1
      %p65 = scmp.ne.s32.totalorder %s60, %s62
      %p66 = scmp.eq.s32.totalorder %s12, 0
      %p67 = por %p65, %p66
      %p68 = scmp.ne.s32.totalorder %s60, %s62
      %p69 = scmp.eq.s32.totalorder %s17, 1
      %p70 = por %p68, %p69
      %p71 = scmp.ne.s32.totalorder %s62, %s63
      %p72 = scmp.eq.s32.totalorder %s17, 0
      %p73 = por %p71, %p72
      %p74 = scmp.ne.s32.totalorder %s62, %s63
      %p75 = scmp.eq.s32.totalorder %s18, 1
      %p76 = por %p74, %p75
      %p78 = scmp.ne.s32.totalorder %s63, %s77
      %p79 = scmp.eq.s32.totalorder %s18, 0
      %p80 = por %p78, %p79
      %s82 = sadd.s32 %s81, 1
      %p85 = scmp.eq.s32.totalorder %s12, 1
      %p86 = scmp.ne.s32.totalorder %s81, %s83
      %p87 = scmp.eq.s32.totalorder %s12, 0
      %p88 = por %p86, %p87
      %p89 = scmp.ne.s32.totalorder %s81, %s83
      %p90 = scmp.eq.s32.totalorder %s17, 1
      %p91 = por %p89, %p90
      %p92 = scmp.ne.s32.totalorder %s83, %s84
      %p93 = scmp.eq.s32.totalorder %s17, 0
      %p94 = por %p92, %p93
      %p95 = scmp.ne.s32.totalorder %s83, %s84
      %p96 = scmp.eq.s32.totalorder %s18, 1
      %p97 = por %p95, %p96
      %p99 = scmp.ne.s32.totalorder %s84, %s98
      %p100 = scmp.eq.s32.totalorder %s18, 0
      %p101 = por %p99, %p100
      %s102 = ssub.s32 %s19, %s31
      %s103 = ssub.s32 %s20, %s27
      %s104 = sor.u32 %s102, %s103
      %p105 = scmp.eq.s32.totalorder %s104, 0
      %s107 = sadd.s32 %s106, 1
      %s108 = scalar_select %p105, %s106, %s107
      %p111 = pneg %p105
      %p112 = scmp.eq.s32.totalorder %s12, 1
      %p113 = por %p111, %p112
      %p114 = scmp.ne.s32.totalorder %s106, %s109
      %p115 = scmp.eq.s32.totalorder %s12, 0
      %p116 = por %p114, %p115
      %p117 = scmp.ne.s32.totalorder %s106, %s109
      %p118 = scmp.eq.s32.totalorder %s17, 1
      %p119 = por %p117, %p118
      %p120 = scmp.ne.s32.totalorder %s109, %s110
      %p121 = scmp.eq.s32.totalorder %s17, 0
      %p122 = por %p120, %p121
      %p123 = scmp.ne.s32.totalorder %s109, %s110
      %p124 = scmp.eq.s32.totalorder %s18, 1
      %p125 = por %p123, %p124
      %p127 = scmp.ne.s32.totalorder %s110, %s126
      %p128 = scmp.eq.s32.totalorder %s18, 0
      %p129 = por %p127, %p128
      %p130 = scmp.le.s32.totalorder 1, %s12
      %p131 = scmp.lt.s32.totalorder %s12, 3
      %p132 = pnand %p130, %p131
      %p133 = pneg %p132
      // Predicated region
      $region9: #{tpu_custom_call.1} parent=5 // pred_check
        _
      $region10: #{tpu_custom_call.1} parent=5 // pred_check_branch
        %135 = sbr.rel (%p132) target = $region12
      $region11: #{tpu_custom_call.1} parent=5 // pred_region
        %s136 = ssub.s32 %s12, 1
        // Predicated region
        $region13: #{tpu_custom_call.1} parent=11 // pred_check
          %p137 = pneg %p73
        $region14: #{tpu_custom_call.1} parent=11 // pred_check_branch
          %139 = sbr.rel (%p137) target = $region16
        $region15: #{tpu_custom_call.1} parent=11 // pred_region
          _
        $region16: #{tpu_custom_call.1} parent=11 // pred_fallthru
          _
        // Predicated region
        $region17: #{tpu_custom_call.1} parent=11 // pred_check
          %p140 = pneg %p94
        $region18: #{tpu_custom_call.1} parent=11 // pred_check_branch
          %142 = sbr.rel (%p140) target = $region20
        $region19: #{tpu_custom_call.1} parent=11 // pred_region
          _
        $region20: #{tpu_custom_call.1} parent=11 // pred_fallthru
          _
      $region12: #{tpu_custom_call.1} parent=5 // pred_fallthru
        _
      %p143 = scmp.lt.s32.totalorder %s12, 2
      // Predicated region
      $region21: #{tpu_custom_call.1} parent=5 // pred_check
        %p144 = pneg %p143
      $region22: #{tpu_custom_call.1} parent=5 // pred_check_branch
        %146 = sbr.rel (%p144) target = $region24
      $region23: #{tpu_custom_call.1} parent=5 // pred_region
        // Predicated region
        $region25: #{tpu_custom_call.1} parent=23 // pred_check
          %p147 = pneg %p46
        $region26: #{tpu_custom_call.1} parent=23 // pred_check_branch
          %149 = sbr.rel (%p147) target = $region28
        $region27: #{tpu_custom_call.1} parent=23 // pred_region
          %s150 = smul.u32 2, %s20
          %p151 = scmp.lt.s32.totalorder %s19, 1
          %s152 = scalar_select %p151, %s19, 1
          %p153 = scmp.lt.s32.totalorder %s150, 1
          %s154 = scalar_select %p153, %s150, 1
          %s155 = smul.addr %s152, 2
          %s156 = sadd.s32 %s154, %s155
          %s157 = smul.addr %s156, 4
          %s158 = scalar_lea.vmem %s0, %s157
          %s159 = smul.u32 2, %s20
        $region28: #{tpu_custom_call.1} parent=23 // pred_fallthru
          _
      $region24: #{tpu_custom_call.1} parent=5 // pred_fallthru
        _
      %p160 = scmp.le.s32.totalorder 1, %s12
      %p161 = scmp.lt.s32.totalorder %s12, 3
      %p162 = pnand %p160, %p161
      %p163 = pneg %p162
      // Predicated region
      $region29: #{tpu_custom_call.1} parent=5 // pred_check
        _
      $region30: #{tpu_custom_call.1} parent=5 // pred_check_branch
        %165 = sbr.rel (%p162) target = $region32
      $region31: #{tpu_custom_call.1} parent=5 // pred_region
        %s166 = ssub.s32 %s12, 1
        %s167 = smul.u32 2, %s22
        %p168 = scmp.lt.s32.totalorder %s21, 1
        %s169 = scalar_select %p168, %s21, 1
        %p170 = scmp.lt.s32.totalorder %s167, 1
        %s171 = scalar_select %p170, %s167, 1
        %s172 = smul.addr %s169, 2
        %s173 = sadd.s32 %s171, %s172
        %s174 = smul.addr %s173, 4
        %s175 = scalar_lea.vmem %s0, %s174
        %p176 = pneg %p52
        %p177 = pneg %p49
        %p178 = pneg %p73
        %p179 = pneg %p70
        %p180 = pneg %p94
        %p181 = pneg %p91
        %p182 = pneg %p122
        %p183 = pneg %p119
        %s184 = sand.u32 %s109, 1
        %s185 = scalar_lea.sflag [#allocation3], %s184
        %s186 = sand.u32 %s109, 1
        %s187 = smul.addr %s186, 48
        %s188 = scalar_lea.vmem [#allocation2], %s187
        %s189 = smul.u32 2, %s22
        %p190 = scmp.lt.s32.totalorder %s21, 1
        %s191 = scalar_select %p190, %s21, 1
        %p192 = scmp.lt.s32.totalorder %s189, 1
        %s193 = scalar_select %p192, %s189, 1
        %s194 = smul.addr %s191, 2
        %s195 = sadd.s32 %s193, %s194
        %s196 = smul.addr %s195, 4
        %s197 = scalar_lea.vmem %s0, %s196
        %s198 = smul.u32 2, %s22
        %s199 = smul.u32 2, %s22
        %v200 = vld [vmem:[%s1] sm:$0xff]
        %v201 = vld [vmem:[%s1 + $0x8] sm:$0xff]
        %v202 = vld [vmem:[%s1 + $0x10] sm:$0xff]
        %v203 = vld [vmem:[%s197] sm:$0xff]
        %v204 = vld [vmem:[%s2] sm:$0xff]
        %v205 = vld [vmem:[%s2 + $0x8] sm:$0xff]
        %v206 = vld [vmem:[%s2 + $0x10] sm:$0xff]
        %208 = vset.pattern.permute.xlu0 0
        %209 = vperm.xlu0 %208, %v204
        %v210 = vpop.permute.xlu0 %209
        %213 = vset.pattern.permute.xlu0 0
        %214 = vperm.xlu0 %213, %v205
        %v215 = vpop.permute.xlu0 %214
        %218 = vset.pattern.permute.xlu0 0
        %219 = vperm.xlu0 %218, %v206
        %v220 = vpop.permute.xlu0 %219
        %223 = vst [vmem:[#allocation1] ss:$2 sm:$0xff] %v203
        %v224 = vld.sshfl [vmem:[#allocation1] sm:$0xff pattern:$0x75316420]
        %v225 = vld.sshfl [vmem:[#allocation1 + $0x8] sm:$0xff pattern:$0x75316420]
        %vm226 = vcmask 31744
        %v228 = vsel %vm226, %v200, 0
        %v231 = vsel %vm226, %v201, 0
        %v234 = vsel %vm226, %v202, 0
        %vm236 = vcmask 1043456
        %v237 = vsel %vm236, %v224, 0
        %v239 = vsel %vm236, %v225, 0
        %241 = vmatpush.msra.mxu0 0.0
        %242 = vmatpush.msra.mxu0 0.0
        %243 = vmatpush.msra.mxu0 0.0
        %244 = vmatpush.msra.mxu0 0.0
        %245 = vmatpush.msra.mxu0 0.0
        %246 = vmatpush.msra.mxu0 0.0
        %247 = vmatpush.msra.mxu0 0.0
        %248 = vmatpush.msra.mxu0 0.0
        %249 = vmatpush.msra.mxu0 0.0
        %250 = vmatpush.msra.mxu0 0.0
        %251 = vmatpush.msra.mxu0 0.0
        %252 = vmatpush.msra.mxu0 0.0
        %253 = vmatpush.msra.mxu0 0.0
        %254 = vmatpush.msra.mxu0 0.0
        %255 = vmatpush.msra.mxu0 0.0
        %256 = vmatpush.msra.mxu0 %v237
        %257 = vmatmul.f32.gmra.mxu0 %v228
        %v258 = vpop.f32.mrf.mxu0
        %v259 = vadd.f32 %v210, %v258
        %260 = vmatmul.f32.gmra.mxu0 %v231
        %v261 = vpop.f32.mrf.mxu0
        %v262 = vadd.f32 %v215, %v261
        %263 = vmatmul.f32.gmra.mxu0 %v234
        %v264 = vpop.f32.mrf.mxu0
        %v265 = vadd.f32 %v220, %v264
        %266 = vdwg.mxu0
        %267 = vmatpush.msra.mxu0 0.0
        %268 = vmatpush.msra.mxu0 0.0
        %269 = vmatpush.msra.mxu0 0.0
        %270 = vmatpush.msra.mxu0 0.0
        %271 = vmatpush.msra.mxu0 0.0
        %272 = vmatpush.msra.mxu0 0.0
        %273 = vmatpush.msra.mxu0 0.0
        %274 = vmatpush.msra.mxu0 0.0
        %275 = vmatpush.msra.mxu0 0.0
        %276 = vmatpush.msra.mxu0 0.0
        %277 = vmatpush.msra.mxu0 0.0
        %278 = vmatpush.msra.mxu0 0.0
        %279 = vmatpush.msra.mxu0 0.0
        %280 = vmatpush.msra.mxu0 0.0
        %281 = vmatpush.msra.mxu0 0.0
        %282 = vmatpush.msra.mxu0 %v239
        %283 = vmatmul.f32.gmra.mxu0 %v228
        %v284 = vpop.f32.mrf.mxu0
        %v285 = vadd.f32 %v210, %v284
        %286 = vmatmul.f32.gmra.mxu0 %v231
        %v287 = vpop.f32.mrf.mxu0
        %v288 = vadd.f32 %v215, %v287
        %289 = vmatmul.f32.gmra.mxu0 %v234
        %v290 = vpop.f32.mrf.mxu0
        %v291 = vadd.f32 %v220, %v290
        %292 = vdwg.mxu0
        %293 = vst [vmem:[%s188] sm:$0xff] %v259
        %294 = vst [vmem:[%s188 + $0x8] sm:$0xff] %v285
        %295 = vst [vmem:[%s188 + $0x10] sm:$0xff] %v262
        %296 = vst [vmem:[%s188 + $0x18] sm:$0xff] %v288
        %297 = vst [vmem:[%s188 + $0x20] sm:$0xff] %v265
        %298 = vst [vmem:[%s188 + $0x28] sm:$0xff] %v291
        %s299 = sand.u32 %s109, 1
        %s300 = scalar_lea.sflag [#allocation3], %s299
        %s301 = sand.u32 %s109, 1
        %s302 = smul.addr %s301, 48
        %s303 = scalar_lea.vmem [#allocation2], %s302
        // Predicated region
        $region33: #{tpu_custom_call.1} parent=31 // pred_check
          %p304 = pneg %p119
        $region34: #{tpu_custom_call.1} parent=31 // pred_check_branch
          %306 = sbr.rel (%p304) target = $region36
        $region35: #{tpu_custom_call.1} parent=31 // pred_region
          %s307 = smul.u32 2, %s22
          %309 = vsyncadd %s300, 0
          %s310 = smul.addr %s21, 6
          %s311 = sadd.s32 %s307, %s310
          %s312 = smul.addr %s311, 8
          %s313 = scalar_lea.hbm %s3, %s312
          %s314 = sshll.u32 %s303, 4
          %s315 = int_to_ptr.vmem [resolvable:$true] %s314
          %s316 = sshll.u32 %s313, 4
          %s317 = int_to_ptr.hbm [resolvable:$true] %s316
          %322 = dma.vmem_to_hbm [thread:$0]  %s315, 768, %s317, %s300, 256, 256, 16
        $region36: #{tpu_custom_call.1} parent=31 // pred_fallthru
          _
      $region32: #{tpu_custom_call.1} parent=5 // pred_fallthru
        _
      %p323 = scmp.le.s32.totalorder 2, %s12
      // Predicated region
      $region37: #{tpu_custom_call.1} parent=5 // pred_check
        %p324 = pneg %p323
      $region38: #{tpu_custom_call.1} parent=5 // pred_check_branch
        %326 = sbr.rel (%p324) target = $region40
      $region39: #{tpu_custom_call.1} parent=5 // pred_region
        %s327 = ssub.s32 %s12, 2
        // Predicated region
        $region41: #{tpu_custom_call.1} parent=39 // pred_check
          %p328 = pneg %p125
        $region42: #{tpu_custom_call.1} parent=39 // pred_check_branch
          %330 = sbr.rel (%p328) target = $region44
        $region43: #{tpu_custom_call.1} parent=39 // pred_region
          %s331 = sand.u32 %s110, 1
          %s332 = scalar_lea.sflag [#allocation3], %s331
          %s333 = sand.u32 %s110, 1
          %s334 = smul.addr %s333, 48
          %s335 = scalar_lea.vmem [#allocation2], %s334
          %337 = dma.done %s332, 768
        $region44: #{tpu_custom_call.1} parent=39 // pred_fallthru
          _
      $region40: #{tpu_custom_call.1} parent=5 // pred_fallthru
        _
    $region6: #{tpu_custom_call.1} parent=1 // loop_footer
      %s16 = sadd.s32 1, %s12
    $region7: #{tpu_custom_call.1} parent=1 // loop_footer_branch
      %11 = sbr.rel target = $region3
    $region8: #{tpu_custom_call.1} parent=1 // loop_exit
      _
    %338 = vsyncpa [#allocation3], 1
    %s339 = scalar_lea.sflag [#allocation3], 1
    %340 = vsyncpa %s339, 1

</llo_original>
